<compile_context>
chip_gen: v7x
topology: tpu7x:2x2x1
jax: 0.10.0
libtpu: 0.0.40
codegen_flags: <defaults>
</compile_context>

<pallas_src>
import jax
import jax.numpy as jnp
from jax.experimental import pallas as pl
from jax.experimental.pallas import tpu as pltpu

_BN_EPS = 1e-5
_VMEM_LIMIT = 32 * 1024 * 1024   # fits every generation incl. v7x (64 MiB phys)


# ---------------------------------------------------------------------------
# small helpers
# ---------------------------------------------------------------------------
def _round_up(x, m):
    return ((x + m - 1) // m) * m


def _pick_tm(m_rows, bytes_per_row, budget=2 * 1024 * 1024):
    """Largest multiple-of-8 row tile (<=1024) whose double-buffered block
    stays within ~budget bytes of VMEM."""
    tm = max(8, min(1024, budget // max(1, bytes_per_row)))
    tm = (tm // 8) * 8
    return max(8, min(tm, _round_up(m_rows, 8)))


def _fold_bn(bn):
    """Fold inference-mode BatchNorm into per-channel scale/bias (f32)."""
    gamma, beta, mean, var = bn
    s = gamma * jax.lax.rsqrt(var + _BN_EPS)
    b = beta - mean * s
    return s.astype(jnp.float32), b.astype(jnp.float32)


# ---------------------------------------------------------------------------
# Kernel 1: 1x1 conv (+bias) as a bf16 matmul over adaptive row tiles
# ---------------------------------------------------------------------------
def _conv1x1_kernel(x_ref, w_ref, b_ref, o_ref):
    acc = jnp.dot(x_ref[...], w_ref[...], preferred_element_type=jnp.float32)
    o_ref[...] = (acc + b_ref[...]).astype(o_ref.dtype)


def conv1x1(x, w, bias):
    """x: (N,H,W,Cin) bf16/f32, w: (Cin,Cout), bias: (Cout,) -> (N,H,W,Cout) bf16."""
    N, H, W, Cin = x.shape
    Cout = w.shape[-1]
    M = N * H * W
    TM = _pick_tm(M, (Cin + Cout) * 2)
    G = pl.cdiv(M, TM)
    Mp = G * TM
    xm = x.reshape(M, Cin).astype(jnp.bfloat16)
    if Mp != M:
        xm = jnp.pad(xm, ((0, Mp - M), (0, 0)))
    out = pl.pallas_call(
        _conv1x1_kernel,
        out_shape=jax.ShapeDtypeStruct((Mp, Cout), jnp.bfloat16),
        grid=(G,),
        in_specs=[pl.BlockSpec((TM, Cin), lambda i: (i, 0)),
                  pl.BlockSpec((Cin, Cout), lambda i: (0, 0)),
                  pl.BlockSpec((1, Cout), lambda i: (0, 0))],
        out_specs=pl.BlockSpec((TM, Cout), lambda i: (i, 0)),
        compiler_params=pltpu.CompilerParams(
            dimension_semantics=("parallel",),
            vmem_limit_bytes=_VMEM_LIMIT),
    )(xm, w.astype(jnp.bfloat16), bias.reshape(1, Cout).astype(jnp.float32))
    return out[:M].reshape(N, H, W, Cout)


# ---------------------------------------------------------------------------
# Kernel 2: fused ReceptiveConv (4 dilated 3x3 + BN + ReLU, 1x1 agg + BN +
#           residual + ReLU) — one pallas_call per module, one batch image
#           per grid step, everything resident in VMEM.
# Layout: flattened zero-padded image (Rp rows = Hp*Wp rounded to 8, ch last).
# A dilated tap (kh,kw) of the image is the row-window shifted by
# delta = (kh-1)*d*Wp + (kw-1)*d, read from an over-padded VMEM scratch whose
# outer E rows stay zero (exact PyTorch zero-padding semantics at interior
# pixels; halo rows carry finite garbage and are sliced off in glue).
# ---------------------------------------------------------------------------
def _make_rc_kernel(dils, Wp, Rp, E, width, C):
    def kernel(xs_ref, xf_ref, m_ref, wbr_ref, s_ref, b_ref, w3_ref,
               s3_ref, b3_ref, o_ref, pad_scr):
        pad_scr[...] = jnp.zeros_like(pad_scr)          # outer halo stays 0
        mask = m_ref[...]                               # (Rp, 1) interior mask
        agg = jnp.zeros((Rp, C), jnp.float32)
        sp = None
        for i in range(4):
            d = dils[i]
            branch = xs_ref[0, i].astype(jnp.float32)   # (Rp, width)
            if i > 0:
                # previous branch output, halo re-zeroed so padding stays exact
                branch = branch + sp * mask
            pad_scr[E:E + Rp, :] = branch
            acc = jnp.zeros((Rp, width), jnp.float32)
            for kh in range(3):
                for kw in range(3):
                    delta = (kh - 1) * d * Wp + (kw - 1) * d
                    tap = pad_scr[E + delta:E + delta + Rp, :]
                    acc = acc + jnp.dot(tap.astype(jnp.bfloat16),
                                        wbr_ref[i, 3 * kh + kw],
                                        preferred_element_type=jnp.float32)
            sp = jnp.maximum(acc * s_ref[i] + b_ref[i], 0.0)       # BN + ReLU
            agg = agg + jnp.dot(sp.astype(jnp.bfloat16), w3_ref[i],
                                preferred_element_type=jnp.float32)
        y = agg * s3_ref[...] + b3_ref[...] + xf_ref[0].astype(jnp.float32)
        o_ref[0] = jnp.maximum(y, 0.0).astype(o_ref.dtype)
    return kernel


def receptive_conv(x, p):
    """ReceptiveConv forward. x: (N,H,W,C) with C = 4*width."""
    N, H, W, C = x.shape
    width = p['width']
    dils = tuple(int(d) for d in p['dilation'])
    dmax = max(dils)
    Hp, Wp = H + 2 * dmax, W + 2 * dmax
    R = Hp * Wp
    Rp = _round_up(R, 8)
    E = _round_up(dmax * (Wp + 1), 8)       # >= max |tap shift|
    Rtot = Rp + 2 * E

    xpad = jnp.pad(x.astype(jnp.bfloat16),
                   ((0, 0), (dmax, dmax), (dmax, dmax), (0, 0)))
    xfull = xpad.reshape(N, R, C)
    xsplit = jnp.transpose(xpad.reshape(N, Hp, Wp, 4, width),
                           (0, 3, 1, 2, 4)).reshape(N, 4, R, width)
    if Rp != R:
        xfull = jnp.pad(xfull, ((0, 0), (0, Rp - R), (0, 0)))
        xsplit = jnp.pad(xsplit, ((0, 0), (0, 0), (0, Rp - R), (0, 0)))

    rr = jnp.arange(R) // Wp
    cc = jnp.arange(R) % Wp
    mask = ((rr >= dmax) & (rr < Hp - dmax) &
            (cc >= dmax) & (cc < Wp - dmax)).astype(jnp.float32)
    mask = jnp.pad(mask, (0, Rp - R)).reshape(Rp, 1)

    wbr = jnp.stack([p['convs'][i].reshape(9, width, width) for i in range(4)],
                    0).astype(jnp.bfloat16)                         # (4,9,w,w)
    bn_s, bn_b = zip(*[_fold_bn(p['bns'][i]) for i in range(4)])
    bn_s = jnp.stack(bn_s, 0).reshape(4, 1, width)
    bn_b = jnp.stack(bn_b, 0).reshape(4, 1, width)
    s3, b3 = _fold_bn(p['bn3'])
    w3 = p['w3'].reshape(4, width, C).astype(jnp.bfloat16)

    out = pl.pallas_call(
        _make_rc_kernel(dils, Wp, Rp, E, width, C),
        out_shape=jax.ShapeDtypeStruct((N, Rp, C), jnp.bfloat16),
        grid=(N,),
        in_specs=[
            pl.BlockSpec((1, 4, Rp, width), lambda n: (n, 0, 0, 0)),
            pl.BlockSpec((1, Rp, C), lambda n: (n, 0, 0)),
            pl.BlockSpec((Rp, 1), lambda n: (0, 0)),
            pl.BlockSpec((4, 9, width, width), lambda n: (0, 0, 0, 0)),
            pl.BlockSpec((4, 1, width), lambda n: (0, 0, 0)),
            pl.BlockSpec((4, 1, width), lambda n: (0, 0, 0)),
            pl.BlockSpec((4, width, C), lambda n: (0, 0, 0)),
            pl.BlockSpec((1, C), lambda n: (0, 0)),
            pl.BlockSpec((1, C), lambda n: (0, 0)),
        ],
        out_specs=pl.BlockSpec((1, Rp, C), lambda n: (n, 0, 0)),
        scratch_shapes=[pltpu.VMEM((Rtot, width), jnp.float32)],
        compiler_params=pltpu.CompilerParams(
            dimension_semantics=("parallel",),
            vmem_limit_bytes=_VMEM_LIMIT),
    )(xsplit, xfull, mask, wbr, bn_s, bn_b, w3,
      s3.reshape(1, C), b3.reshape(1, C))

    out = out[:, :R, :].reshape(N, Hp, Wp, C)
    return out[:, dmax:dmax + H, dmax:dmax + W, :]


# ---------------------------------------------------------------------------
# Kernel 3: fused 5-way scale-add + ConvBNR(3x3) + edge 1x1 (Cout=1)
# ---------------------------------------------------------------------------
def _make_final_kernel(Wp, Rp, E, C):
    def kernel(sc_ref, f1, f2, f3, f4, f5, wc_ref, s_ref, b_ref, we_ref,
               o_ref, pad_scr):
        feats = (f1, f2, f3, f4, f5)
        mix = jnp.zeros((Rp, C), jnp.float32)
        for i in range(5):
            mix = mix + sc_ref[i] * feats[i][0].astype(jnp.float32)
        pad_scr[...] = jnp.zeros_like(pad_scr)
        pad_scr[E:E + Rp, :] = mix          # halo of mix is already zero
        acc = jnp.zeros((Rp, C), jnp.float32)
        for kh in range(3):
            for kw in range(3):
                delta = (kh - 1) * Wp + (kw - 1)
                tap = pad_scr[E + delta:E + delta + Rp, :]
                acc = acc + jnp.dot(tap.astype(jnp.bfloat16),
                                    wc_ref[3 * kh + kw],
                                    preferred_element_type=jnp.float32)
        x1c = jnp.maximum(acc * s_ref[...] + b_ref[...], 0.0)   # BN + ReLU
        edge = jnp.dot(x1c, we_ref[...], preferred_element_type=jnp.float32)
        o_ref[0] = (edge + sc_ref[5]).astype(o_ref.dtype)        # + edge bias
    return kernel


def fused_scaleadd_convbnr_edge(feats, scale, w3x3, bn, w_edge, b_edge):
    """feats: 5 x (N,H,W,C). Returns NCHW (N,1,H,W) f32."""
    N, H, W, C = feats[0].shape
    Hp, Wp = H + 2, W + 2
    R = Hp * Wp
    Rp = _round_up(R, 8)
    E = _round_up(Wp + 1, 8)
    Rtot = Rp + 2 * E

    def prep(f):
        fp = jnp.pad(f.astype(jnp.bfloat16), ((0, 0), (1, 1), (1, 1), (0, 0)))
        fp = fp.reshape(N, R, C)
        return jnp.pad(fp, ((0, 0), (0, Rp - R), (0, 0))) if Rp != R else fp

    fpad = [prep(f) for f in feats]
    s, b = _fold_bn(bn)
    scal = jnp.concatenate([scale.astype(jnp.float32),
                            b_edge.reshape(1).astype(jnp.float32)], 0)  # (6,)
    wc = w3x3.reshape(9, C, C).astype(jnp.bfloat16)

    out = pl.pallas_call(
        _make_final_kernel(Wp, Rp, E, C),
        out_shape=jax.ShapeDtypeStruct((N, Rp, 1), jnp.float32),
        grid=(N,),
        in_specs=[pl.BlockSpec(memory_space=pltpu.MemorySpace.SMEM)]
                 + [pl.BlockSpec((1, Rp, C), lambda n: (n, 0, 0))
                    for _ in range(5)]
                 + [pl.BlockSpec((9, C, C), lambda n: (0, 0, 0)),
                    pl.BlockSpec((1, C), lambda n: (0, 0)),
                    pl.BlockSpec((1, C), lambda n: (0, 0)),
                    pl.BlockSpec((C, 1), lambda n: (0, 0))],
        out_specs=pl.BlockSpec((1, Rp, 1), lambda n: (n, 0, 0)),
        scratch_shapes=[pltpu.VMEM((Rtot, C), jnp.float32)],
        compiler_params=pltpu.CompilerParams(
            dimension_semantics=("parallel",),
            vmem_limit_bytes=_VMEM_LIMIT),
    )(scal, *fpad, wc, s.reshape(1, C), b.reshape(1, C),
      w_edge.astype(jnp.float32))

    out = out[:, :R, 0].reshape(N, Hp, Wp)[:, 1:1 + H, 1:1 + W]
    return out[:, None, :, :]


# ---------------------------------------------------------------------------
# Bilinear upsampling (align_corners=False) — exact, as JAX glue
# ---------------------------------------------------------------------------
def _interp_matrix(in_size, out_size):
    if in_size == out_size:
        return jnp.eye(out_size, dtype=jnp.float32)
    ratio = in_size / out_size
    o = jnp.arange(out_size, dtype=jnp.float32)
    src = jnp.maximum((o + 0.5) * ratio - 0.5, 0.0)
    i0 = jnp.clip(jnp.floor(src).astype(jnp.int32), 0, in_size - 1)
    i1 = jnp.minimum(i0 + 1, in_size - 1)
    lam = src - i0.astype(jnp.float32)
    rows = jnp.arange(out_size)
    A = jnp.zeros((out_size, in_size), jnp.float32)
    A = A.at[rows, i0].add(1.0 - lam)
    A = A.at[rows, i1].add(lam)
    return A


def upsample_bilinear(x, size):
    N, Hin, Win, C = x.shape
    Hout, Wout = size
    if (Hin, Win) == (Hout, Wout):
        return x
    Ah = _interp_matrix(Hin, Hout)
    Aw = _interp_matrix(Win, Wout)
    y = jnp.einsum('oh,nhwc->nowc', Ah, x)
    y = jnp.einsum('pw,nowc->nopc', Aw, y)
    return y


# ---------------------------------------------------------------------------
# EGM_each_ms_scaleadd_uplarge forward
# ---------------------------------------------------------------------------
def egm_forward(params, x5, x4, x3, x2, x1):
    """NCHW inputs (PyTorch convention); output (N, 1, H1, W1) NCHW f32."""
    nhwc = lambda t: jnp.transpose(t, (0, 2, 3, 1)).astype(jnp.bfloat16)
    x5, x4, x3, x2, x1 = map(nhwc, (x5, x4, x3, x2, x1))
    size = x1.shape[1:3]

    x5_fea = receptive_conv(conv1x1(x5, *params['reduce5']), params['getf5'])
    x5u = upsample_bilinear(conv1x1(x5_fea, *params['reduce51']), size)

    x4_fea = receptive_conv(conv1x1(x4, *params['reduce4']), params['getf4'])
    x4u = upsample_bilinear(conv1x1(x4_fea, *params['reduce41']), size)

    x3_fea = receptive_conv(conv1x1(x3, *params['reduce3']), params['getf3'])
    x3u = upsample_bilinear(conv1x1(x3_fea, *params['reduce31']), size)

    x2_fea = receptive_conv(conv1x1(x2, *params['reduce2']), params['getf2'])
    x2_fea = conv1x1(x2_fea, *params['reduce21'])
    x2u = upsample_bilinear(x2_fea, size)

    x1_fea = receptive_conv(x1, params['getf1'])

    return fused_scaleadd_convbnr_edge(
        [x1_fea, x2u, x3u, x4u, x5u], params['scale'],
        params['conv_w'], params['conv_bn'],
        params['edge'][0], params['edge'][1])


# ---------------------------------------------------------------------------
# Deterministic parameter construction (shapes follow the module __init__)
# ---------------------------------------------------------------------------
def make_params(key, backbone='resnet18'):
    if backbone == 'resnet50':
        oc = [64, 256, 512, 1024, 2048]
        nc = [64, 64, 128, 256, 512]
    else:
        oc = [64, 64, 128, 256, 512]
        nc = [64, 64, 64, 64, 128]
    keys = iter(jax.random.split(key, 512))
    nk = lambda: next(keys)

    def conv_w(shape, fan_in):
        return jax.random.normal(nk(), shape, jnp.float32) * (0.5 / float(fan_in) ** 0.5)

    def bn_p(c):  # (gamma, beta, running_mean, running_var) — inference mode
        gamma = 1.0 + 0.1 * jax.random.normal(nk(), (c,), jnp.float32)
        beta = 0.1 * jax.random.normal(nk(), (c,), jnp.float32)
        mean = 0.1 * jax.random.normal(nk(), (c,), jnp.float32)
        var = 0.9 + 0.2 * jax.random.uniform(nk(), (c,), jnp.float32)
        return (gamma, beta, mean, var)

    def reduce_p(cin, cout):  # nn.Conv2d(cin, cout, 1) with bias
        return (conv_w((cin, cout), cin),
                0.05 * jax.random.normal(nk(), (cout,), jnp.float32))

    def rc_p(planes, dilation):  # ReceptiveConv(planes, planes, dilation)
        width = planes * 16 // 64
        return dict(
            width=width,
            dilation=tuple(dilation),
            convs=[conv_w((3, 3, width, width), 9 * width) for _ in range(4)],
            bns=[bn_p(width) for _ in range(4)],
            w3=conv_w((width * 4, planes), width * 4),
            bn3=bn_p(planes),
        )

    params = dict(
        reduce2=reduce_p(oc[1], nc[1]),
        reduce3=reduce_p(oc[2], nc[2]),
        reduce4=reduce_p(oc[3], nc[3]),
        reduce5=reduce_p(oc[4], nc[4]),
        getf1=rc_p(nc[0], [1, 2, 4, 8]),
        getf2=rc_p(nc[1], [1, 2, 4, 8]),
        getf3=rc_p(nc[2], [1, 2, 4, 8]),
        getf4=rc_p(nc[3], [1, 2, 3, 4]),
        getf5=rc_p(nc[4], [1, 2, 3, 4]),
        reduce51=reduce_p(nc[4], nc[1]),
        reduce41=reduce_p(nc[3], nc[1]),
        reduce31=reduce_p(nc[2], nc[1]),
        reduce21=reduce_p(nc[1], nc[1]),
        conv_w=conv_w((3, 3, nc[1], nc[1]), 9 * nc[1]),
        conv_bn=bn_p(nc[1]),
        edge=reduce_p(nc[1], 1),
        scale=jnp.array([1.0, 0.9, 0.8, 0.7, 0.6], jnp.float32),
    )
    return params, oc, nc


if __name__ == "__main__":
    key = jax.random.PRNGKey(0)
    pkey, k5, k4, k3, k2, k1 = jax.random.split(key, 6)
    params, oc, nc = make_params(pkey, backbone='resnet18')

    N = 2
    # NCHW inputs like the PyTorch module: x1 is the highest resolution.
    x1 = jax.random.normal(k1, (N, oc[0], 16, 16), jnp.float32)
    x2 = jax.random.normal(k2, (N, oc[1], 8, 8), jnp.float32)
    x3 = jax.random.normal(k3, (N, oc[2], 8, 8), jnp.float32)
    x4 = jax.random.normal(k4, (N, oc[3], 4, 4), jnp.float32)
    x5 = jax.random.normal(k5, (N, oc[4], 4, 4), jnp.float32)

    out = jax.block_until_ready(egm_forward(params, x5, x4, x3, x2, x1))
    assert out.shape == (N, 1, 16, 16), out.shape
    assert bool(jnp.all(jnp.isfinite(out)))
    print("KERNEL_OK")
</pallas_src>

<mosaic_0001>
module attributes {stable_mosaic.version = 11 : i64} {
  func.func @_conv1x1_kernel(%arg0: i32, %arg1: memref<32x512xbf16, #tpu.memory_space<vmem>>, %arg2: memref<512x128xbf16, #tpu.memory_space<vmem>>, %arg3: memref<1x128xf32, #tpu.memory_space<vmem>>, %arg4: memref<32x128xbf16, #tpu.memory_space<vmem>>) attributes {dimension_semantics = [#tpu.dimension_semantics<parallel>], iteration_bounds = array<i64: 1>, scalar_prefetch = 0 : i64, scratch_operands = 0 : i64, tpu.core_type = #tpu.core_type<tc>, window_params = [{transform_indices = @transform_0, window_bounds = array<i64: 32, 512>}, {pipeline_mode = #tpu.pipeline_mode<synchronous>, transform_indices = @transform_1, window_bounds = array<i64: 512, 128>}, {pipeline_mode = #tpu.pipeline_mode<synchronous>, transform_indices = @transform_2, window_bounds = array<i64: 1, 128>}, {transform_indices = @transform_3, window_bounds = array<i64: 32, 128>}]} {
    %c0 = arith.constant 0 : index
    %c0_0 = arith.constant 0 : index
    %0 = vector.load %arg1[%c0, %c0_0] : memref<32x512xbf16, #tpu.memory_space<vmem>>, vector<32x512xbf16>
    %c0_1 = arith.constant 0 : index
    %c0_2 = arith.constant 0 : index
    %1 = vector.load %arg2[%c0_1, %c0_2] : memref<512x128xbf16, #tpu.memory_space<vmem>>, vector<512x128xbf16>
    %cst = arith.constant dense<0.000000e+00> : vector<32x128xf32>
    %2 = tpu.matmul %0, %1, %cst {dimension_numbers = #tpu.dot_dimension_numbers<[1], [0], [0], [1], [0, 0, 1, 1], [], []>} : vector<32x512xbf16>, vector<512x128xbf16>, vector<32x128xf32> -> vector<32x128xf32>
    %c0_3 = arith.constant 0 : index
    %c0_4 = arith.constant 0 : index
    %3 = vector.load %arg3[%c0_3, %c0_4] : memref<1x128xf32, #tpu.memory_space<vmem>>, vector<1x128xf32>
    %4 = vector.broadcast %3 : vector<1x128xf32> to vector<32x128xf32>
    %5 = arith.addf %2, %4 : vector<32x128xf32>
    %6 = arith.truncf %5 : vector<32x128xf32> to vector<32x128xbf16>
    %c0_5 = arith.constant 0 : index
    %c0_6 = arith.constant 0 : index
    %7 = vector.load %arg4[%c0_5, %c0_6] : memref<32x128xbf16, #tpu.memory_space<vmem>>, vector<32x128xbf16>
    tpu.vector_store %arg4[%c0_5, %c0_6], %6 {strides = array<i32>} : memref<32x128xbf16, #tpu.memory_space<vmem>>, vector<32x128xbf16>,
    return
  }
  func.func @transform_0(%arg0: i32) -> (i32, i32) {
    %c0_i32 = arith.constant 0 : i32
    %c0_i32_0 = arith.constant 0 : i32
    return %arg0, %c0_i32 : i32, i32
  }
  func.func @transform_1(%arg0: i32) -> (i32, i32) {
    %c0_i32 = arith.constant 0 : i32
    %c0_i32_0 = arith.constant 0 : i32
    %c0_i32_1 = arith.constant 0 : i32
    return %c0_i32, %c0_i32_0 : i32, i32
  }
  func.func @transform_2(%arg0: i32) -> (i32, i32) {
    %c0_i32 = arith.constant 0 : i32
    %c0_i32_0 = arith.constant 0 : i32
    %c0_i32_1 = arith.constant 0 : i32
    return %c0_i32, %c0_i32_0 : i32, i32
  }
  func.func @transform_3(%arg0: i32) -> (i32, i32) {
    %c0_i32 = arith.constant 0 : i32
    %c0_i32_0 = arith.constant 0 : i32
    return %arg0, %c0_i32 : i32, i32
  }
}

</mosaic_0001>

<llo_original>
// kernel: tpu_custom_call.1
$region0: #{tpu_custom_call.1}
  #allocation0 [shape = 'u32[]', space=smem, size = 0x4, offset = 0x4, fixed_abs, tag = 'smem constant byte address 0x4 - core index']
  #allocation1 [shape = 'u32[144,128]{1,0:T(1,128)}', space=vmem, size = 0x12000, scoped, tag = 'internal scratch']
  %s0 = inlined_call_operand.hbm [shape: bf16[32,512], index: 0, kind: input, shape index: {}]
  %s1 = inlined_call_operand.hbm [shape: bf16[512,128], index: 1, kind: input, shape index: {}]
  %s2 = inlined_call_operand.vmem [shape: f32[1,128], index: 2, kind: input, shape index: {}]
  %s3 = inlined_call_operand.hbm [shape: bf16[32,128], index: 3, kind: output, shape index: {}]
  %s4 = sld [smem:[#allocation0]]
  $region30: #{tpu_custom_call.1} parent=0
    _
  %s6 = ssub.s32 1, %s4
  %s7 = scalar_select 0, %s6, %s4
  $region1: #{tpu_custom_call.1} parent=0
    #allocation2 [shape = 'u8[32768]{0}', space=vmem, size = 0x8000, scoped, tag = 'input window, operand 0, single buffered']
    #allocation3 [shape = 's32[1]{0}', space=sflag, size = 0x4, scoped, tag = 'scoped memory for tpu_custom_call.1']
    #allocation4 [shape = 's32[1]{0}', space=sflag, size = 0x4, scoped, tag = 'scoped memory for tpu_custom_call.1']
    #allocation5 [shape = 'u8[131072]{0}', space=vmem, size = 0x20000, scoped, tag = 'input window, operand 1, single buffered']
    #allocation6 [shape = 's32[1]{0}', space=sflag, size = 0x4, scoped, tag = 'scoped memory for tpu_custom_call.1']
    #allocation7 [shape = 'u8[8192]{0}', space=vmem, size = 0x2000, scoped, tag = 'output window, operand 0, single buffered']
    %8 = vsyncpa [#allocation3], 0
    %9 = vsyncpa [#allocation6], 0
    %10 = vsyncpa [#allocation4], 0
    // Predicated region
    $region2: #{tpu_custom_call.1} parent=1 // pred_check
      _
    $region3: #{tpu_custom_call.1} parent=1 // pred_check_branch
      %12 = sbr.rel (0) target = $region5
    $region4: #{tpu_custom_call.1} parent=1 // pred_region
      %s14 = ssub.s32 1024, 1024
      %15 = vsyncadd [#allocation3], %s14
      %s16 = sshll.u32 [#allocation2], 4
      %s17 = int_to_ptr.vmem [resolvable:$true] %s16
      %22 = dma.hbm_to_vmem [thread:$0]  %s0, 1024, %s17, [#allocation3], 256, 256, 16
    $region5: #{tpu_custom_call.1} parent=1 // pred_fallthru
      _
    // Predicated region
    $region6: #{tpu_custom_call.1} parent=1 // pred_check
      _
    $region7: #{tpu_custom_call.1} parent=1 // pred_check_branch
      %24 = sbr.rel (0) target = $region9
    $region8: #{tpu_custom_call.1} parent=1 // pred_region
      %s26 = ssub.s32 4096, 4096
      %27 = vsyncadd [#allocation6], %s26
      %s28 = sshll.u32 [#allocation5], 4
      %s29 = int_to_ptr.vmem [resolvable:$true] %s28
      %34 = dma.hbm_to_vmem [thread:$0]  %s1, 4096, %s29, [#allocation6], 64, 64, 4
    $region9: #{tpu_custom_call.1} parent=1 // pred_fallthru
      _
    // Predicated region
    $region10: #{tpu_custom_call.1} parent=1 // pred_check
      _
    $region11: #{tpu_custom_call.1} parent=1 // pred_check_branch
      %36 = sbr.rel (0) target = $region13
    $region12: #{tpu_custom_call.1} parent=1 // pred_region
      _
    $region13: #{tpu_custom_call.1} parent=1 // pred_fallthru
      _
    // Predicated region
    $region14: #{tpu_custom_call.1} parent=1 // pred_check
      _
    $region15: #{tpu_custom_call.1} parent=1 // pred_check_branch
      %38 = sbr.rel (0) target = $region17
    $region16: #{tpu_custom_call.1} parent=1 // pred_region
      %39 = dma.done [#allocation3], 1024
    $region17: #{tpu_custom_call.1} parent=1 // pred_fallthru
      _
    // Predicated region
    $region18: #{tpu_custom_call.1} parent=1 // pred_check
      _
    $region19: #{tpu_custom_call.1} parent=1 // pred_check_branch
      %41 = sbr.rel (0) target = $region21
    $region20: #{tpu_custom_call.1} parent=1 // pred_region
      %42 = dma.done [#allocation6], 4096
    $region21: #{tpu_custom_call.1} parent=1 // pred_fallthru
      _
    %v44 = vld [vmem:[#allocation2] sm:$0xff]
    %v45 = vld [vmem:[#allocation2 + $0x8] sm:$0xff]
    %v46 = vld [vmem:[#allocation2 + $0x10] sm:$0xff]
    %v47 = vld [vmem:[#allocation2 + $0x18] sm:$0xff]
    %v48 = vld [vmem:[#allocation2 + $0x20] sm:$0xff]
    %v49 = vld [vmem:[#allocation2 + $0x28] sm:$0xff]
    %v50 = vld [vmem:[#allocation2 + $0x30] sm:$0xff]
    %v51 = vld [vmem:[#allocation2 + $0x38] sm:$0xff]
    %v52 = vld [vmem:[#allocation5] sm:$0xf]
    %v53 = vld [vmem:[#allocation5 + $0x4] sm:$0xf]
    %v54 = vld [vmem:[#allocation5 + $0x8] sm:$0xf]
    %v55 = vld [vmem:[#allocation5 + $0xc] sm:$0xf]
    %v56 = vld [vmem:[#allocation5 + $0x10] sm:$0xf]
    %v57 = vld [vmem:[#allocation5 + $0x14] sm:$0xf]
    %v58 = vld [vmem:[#allocation5 + $0x18] sm:$0xf]
    %v59 = vld [vmem:[#allocation5 + $0x1c] sm:$0xf]
    %v60 = vld [vmem:[#allocation5 + $0x20] sm:$0xf]
    %v61 = vld [vmem:[#allocation5 + $0x24] sm:$0xf]
    %v62 = vld [vmem:[#allocation5 + $0x28] sm:$0xf]
    %v63 = vld [vmem:[#allocation5 + $0x2c] sm:$0xf]
    %v64 = vld [vmem:[#allocation5 + $0x30] sm:$0xf]
    %v65 = vld [vmem:[#allocation5 + $0x34] sm:$0xf]
    %v66 = vld [vmem:[#allocation5 + $0x38] sm:$0xf]
    %v67 = vld [vmem:[#allocation5 + $0x3c] sm:$0xf]
    %v68 = vld [vmem:[#allocation5 + $0x40] sm:$0xf]
    %v69 = vld [vmem:[#allocation5 + $0x44] sm:$0xf]
    %v70 = vld [vmem:[#allocation5 + $0x48] sm:$0xf]
    %v71 = vld [vmem:[#allocation5 + $0x4c] sm:$0xf]
    %v72 = vld [vmem:[#allocation5 + $0x50] sm:$0xf]
    %v73 = vld [vmem:[#allocation5 + $0x54] sm:$0xf]
    %v74 = vld [vmem:[#allocation5 + $0x58] sm:$0xf]
    %v75 = vld [vmem:[#allocation5 + $0x5c] sm:$0xf]
    %v76 = vld [vmem:[#allocation5 + $0x60] sm:$0xf]
    %v77 = vld [vmem:[#allocation5 + $0x64] sm:$0xf]
    %v78 = vld [vmem:[#allocation5 + $0x68] sm:$0xf]
    %v79 = vld [vmem:[#allocation5 + $0x6c] sm:$0xf]
    %v80 = vld [vmem:[#allocation5 + $0x70] sm:$0xf]
    %v81 = vld [vmem:[#allocation5 + $0x74] sm:$0xf]
    %v82 = vld [vmem:[#allocation5 + $0x78] sm:$0xf]
    %v83 = vld [vmem:[#allocation5 + $0x7c] sm:$0xf]
    %v84 = vld [vmem:[#allocation5 + $0x80] sm:$0xf]
    %v85 = vld [vmem:[#allocation5 + $0x84] sm:$0xf]
    %v86 = vld [vmem:[#allocation5 + $0x88] sm:$0xf]
    %v87 = vld [vmem:[#allocation5 + $0x8c] sm:$0xf]
    %v88 = vld [vmem:[#allocation5 + $0x90] sm:$0xf]
    %v89 = vld [vmem:[#allocation5 + $0x94] sm:$0xf]
    %v90 = vld [vmem:[#allocation5 + $0x98] sm:$0xf]
    %v91 = vld [vmem:[#allocation5 + $0x9c] sm:$0xf]
    %v92 = vld [vmem:[#allocation5 + $0xa0] sm:$0xf]
    %v93 = vld [vmem:[#allocation5 + $0xa4] sm:$0xf]
    %v94 = vld [vmem:[#allocation5 + $0xa8] sm:$0xf]
    %v95 = vld [vmem:[#allocation5 + $0xac] sm:$0xf]
    %v96 = vld [vmem:[#allocation5 + $0xb0] sm:$0xf]
    %v97 = vld [vmem:[#allocation5 + $0xb4] sm:$0xf]
    %v98 = vld [vmem:[#allocation5 + $0xb8] sm:$0xf]
    %v99 = vld [vmem:[#allocation5 + $0xbc] sm:$0xf]
    %v100 = vld [vmem:[#allocation5 + $0xc0] sm:$0xf]
    %v101 = vld [vmem:[#allocation5 + $0xc4] sm:$0xf]
    %v102 = vld [vmem:[#allocation5 + $0xc8] sm:$0xf]
    %v103 = vld [vmem:[#allocation5 + $0xcc] sm:$0xf]
    %v104 = vld [vmem:[#allocation5 + $0xd0] sm:$0xf]
    %v105 = vld [vmem:[#allocation5 + $0xd4] sm:$0xf]
    %v106 = vld [vmem:[#allocation5 + $0xd8] sm:$0xf]
    %v107 = vld [vmem:[#allocation5 + $0xdc] sm:$0xf]
    %v108 = vld [vmem:[#allocation5 + $0xe0] sm:$0xf]
    %v109 = vld [vmem:[#allocation5 + $0xe4] sm:$0xf]
    %v110 = vld [vmem:[#allocation5 + $0xe8] sm:$0xf]
    %v111 = vld [vmem:[#allocation5 + $0xec] sm:$0xf]
    %v112 = vld [vmem:[#allocation5 + $0xf0] sm:$0xf]
    %v113 = vld [vmem:[#allocation5 + $0xf4] sm:$0xf]
    %v114 = vld [vmem:[#allocation5 + $0xf8] sm:$0xf]
    %v115 = vld [vmem:[#allocation5 + $0xfc] sm:$0xf]
    %v116 = vld [vmem:[%s2] sm:$0x1]
    %v118 = vlaneseq
    %v119 = vshrl.u32 %v118, 7
    %v120 = vsub.s32 0, %v119
    %v121 = vrot.slane %v116, %v120
    %v131 = vunpack.c.l.b16 %v44
    %v132 = vunpack.c.h.b16 %v44
    %v133 = vunpack.c.l.b16 %v45
    %v134 = vunpack.c.h.b16 %v45
    %v135 = vunpack.c.l.b16 %v46
    %v136 = vunpack.c.h.b16 %v46
    %v137 = vunpack.c.l.b16 %v47
    %v138 = vunpack.c.h.b16 %v47
    %v139 = vunpack.c.l.b16 %v48
    %v140 = vunpack.c.h.b16 %v48
    %v141 = vunpack.c.l.b16 %v49
    %v142 = vunpack.c.h.b16 %v49
    %v143 = vunpack.c.l.b16 %v50
    %v144 = vunpack.c.h.b16 %v50
    %v145 = vunpack.c.l.b16 %v51
    %v146 = vunpack.c.h.b16 %v51
    %v147 = vpack.c.b16 %v135, %v131
    %v148 = vpack.c.b16 %v136, %v132
    %v149 = vpack.c.b16 %v137, %v133
    %v150 = vpack.c.b16 %v138, %v134
    %v151 = vpack.c.b16 %v143, %v139
    %v152 = vpack.c.b16 %v144, %v140
    %v153 = vpack.c.b16 %v145, %v141
    %v154 = vpack.c.b16 %v146, %v142
    %v227 = vunpack.c.l.b16 %v52
    %v228 = vunpack.c.l.b16 %v53
    %v229 = vunpack.c.l.b16 %v54
    %v230 = vunpack.c.l.b16 %v55
    %v231 = vunpack.c.l.b16 %v56
    %v232 = vunpack.c.l.b16 %v57
    %v233 = vunpack.c.l.b16 %v58
    %v234 = vunpack.c.l.b16 %v59
    %v235 = vunpack.c.l.b16 %v60
    %v236 = vunpack.c.l.b16 %v61
    %v237 = vunpack.c.l.b16 %v62
    %v238 = vunpack.c.l.b16 %v63
    %v239 = vunpack.c.l.b16 %v64
    %v240 = vunpack.c.l.b16 %v65
    %v241 = vunpack.c.l.b16 %v66
    %v242 = vunpack.c.l.b16 %v67
    %v243 = vunpack.c.l.b16 %v68
    %v244 = vunpack.c.l.b16 %v69
    %v245 = vunpack.c.l.b16 %v70
    %v246 = vunpack.c.l.b16 %v71
    %v247 = vunpack.c.l.b16 %v72
    %v248 = vunpack.c.l.b16 %v73
    %v249 = vunpack.c.l.b16 %v74
    %v250 = vunpack.c.l.b16 %v75
    %v251 = vunpack.c.l.b16 %v76
    %v252 = vunpack.c.l.b16 %v77
    %v253 = vunpack.c.l.b16 %v78
    %v254 = vunpack.c.l.b16 %v79
    %v255 = vunpack.c.l.b16 %v80
    %v256 = vunpack.c.l.b16 %v81
    %v257 = vunpack.c.l.b16 %v82
    %v258 = vunpack.c.l.b16 %v83
    %v259 = vunpack.c.l.b16 %v84
    %v260 = vunpack.c.l.b16 %v85
    %v261 = vunpack.c.l.b16 %v86
    %v262 = vunpack.c.l.b16 %v87
    %v263 = vunpack.c.l.b16 %v88
    %v264 = vunpack.c.l.b16 %v89
    %v265 = vunpack.c.l.b16 %v90
    %v266 = vunpack.c.l.b16 %v91
    %v267 = vunpack.c.l.b16 %v92
    %v268 = vunpack.c.l.b16 %v93
    %v269 = vunpack.c.l.b16 %v94
    %v270 = vunpack.c.l.b16 %v95
    %v271 = vunpack.c.l.b16 %v96
    %v272 = vunpack.c.l.b16 %v97
    %v273 = vunpack.c.l.b16 %v98
    %v274 = vunpack.c.l.b16 %v99
    %v275 = vunpack.c.l.b16 %v100
    %v276 = vunpack.c.l.b16 %v101
    %v277 = vunpack.c.l.b16 %v102
    %v278 = vunpack.c.l.b16 %v103
    %v279 = vunpack.c.l.b16 %v104
    %v280 = vunpack.c.l.b16 %v105
    %v281 = vunpack.c.l.b16 %v106
    %v282 = vunpack.c.l.b16 %v107
    %v283 = vunpack.c.l.b16 %v108
    %v284 = vunpack.c.l.b16 %v109
    %v285 = vunpack.c.l.b16 %v110
    %v286 = vunpack.c.l.b16 %v111
    %v287 = vunpack.c.l.b16 %v112
    %v288 = vunpack.c.l.b16 %v113
    %v289 = vunpack.c.l.b16 %v114
    %v290 = vunpack.c.l.b16 %v115
    %v291 = vpack.c.b16 %v228, %v227
    %v292 = vpack.c.b16 %v230, %v229
    %v293 = vpack.c.b16 %v232, %v231
    %v294 = vpack.c.b16 %v234, %v233
    %v295 = vpack.c.b16 %v236, %v235
    %v296 = vpack.c.b16 %v238, %v237
    %v297 = vpack.c.b16 %v240, %v239
    %v298 = vpack.c.b16 %v242, %v241
    %v299 = vpack.c.b16 %v244, %v243
    %v300 = vpack.c.b16 %v246, %v245
    %v301 = vpack.c.b16 %v248, %v247
    %v302 = vpack.c.b16 %v250, %v249
    %v303 = vpack.c.b16 %v252, %v251
    %v304 = vpack.c.b16 %v254, %v253
    %v305 = vpack.c.b16 %v256, %v255
    %v306 = vpack.c.b16 %v258, %v257
    %v307 = vpack.c.b16 %v260, %v259
    %v308 = vpack.c.b16 %v262, %v261
    %v309 = vpack.c.b16 %v264, %v263
    %v310 = vpack.c.b16 %v266, %v265
    %v311 = vpack.c.b16 %v268, %v267
    %v312 = vpack.c.b16 %v270, %v269
    %v313 = vpack.c.b16 %v272, %v271
    %v314 = vpack.c.b16 %v274, %v273
    %v315 = vpack.c.b16 %v276, %v275
    %v316 = vpack.c.b16 %v278, %v277
    %v317 = vpack.c.b16 %v280, %v279
    %v318 = vpack.c.b16 %v282, %v281
    %v319 = vpack.c.b16 %v284, %v283
    %v320 = vpack.c.b16 %v286, %v285
    %v321 = vpack.c.b16 %v288, %v287
    %v322 = vpack.c.b16 %v290, %v289
    %355 = vmatprep.subr.bf16.mxu0 0
    %356 = vmatpush1.bf16.msra.mxu0 %v291
    %357 = vmatprep.subr.bf16.mxu0 0
    %358 = vmatpush1.bf16.msra.mxu0 %v292
    %359 = vmatprep.subr.bf16.mxu0 0
    %360 = vmatpush1.bf16.msra.mxu0 %v293
    %361 = vmatprep.subr.bf16.mxu0 0
    %362 = vmatpush1.bf16.msra.mxu0 %v294
    %363 = vmatprep.subr.bf16.mxu0 0
    %364 = vmatpush1.bf16.msra.mxu0 %v295
    %365 = vmatprep.subr.bf16.mxu0 0
    %366 = vmatpush1.bf16.msra.mxu0 %v296
    %367 = vmatprep.subr.bf16.mxu0 0
    %368 = vmatpush1.bf16.msra.mxu0 %v297
    %369 = vmatprep.subr.bf16.mxu0 0
    %370 = vmatpush1.bf16.msra.mxu0 %v298
    %371 = vmatprep.subr.bf16.mxu0 0
    %372 = vmatpush1.bf16.msra.mxu0 %v299
    %373 = vmatprep.subr.bf16.mxu0 0
    %374 = vmatpush1.bf16.msra.mxu0 %v300
    %375 = vmatprep.subr.bf16.mxu0 0
    %376 = vmatpush1.bf16.msra.mxu0 %v301
    %377 = vmatprep.subr.bf16.mxu0 0
    %378 = vmatpush1.bf16.msra.mxu0 %v302
    %379 = vmatprep.subr.bf16.mxu0 0
    %380 = vmatpush1.bf16.msra.mxu0 %v303
    %381 = vmatprep.subr.bf16.mxu0 0
    %382 = vmatpush1.bf16.msra.mxu0 %v304
    %383 = vmatprep.subr.bf16.mxu0 0
    %384 = vmatpush1.bf16.msra.mxu0 %v305
    %385 = vmatprep.subr.bf16.mxu0 0
    %386 = vmatpush1.bf16.msra.mxu0 %v306
    %387 = vmatprep.mubr.bf16.mxu0 %v148
    %388 = vmatmul.mubr.bf16.gmra.mrb[0].mxu0 %v147
    %v389 = vpop.f32.mrb[0].mxu0
    %v390 = vadd.f32 %v121, %v389
    %v391 = vpop.f32.mrb[0].mxu0
    %v392 = vpop.f32.mrb[0].mxu0
    %v393 = vadd.f32 %v121, %v392
    %v394 = vpop.f32.mrb[0].mxu0
    %395 = vmatprep.mubr.bf16.mxu0 %v152
    %396 = vmatmul.mubr.bf16.gmra.mrb[0].mxu0 %v151
    %v397 = vpop.f32.mrb[0].mxu0
    %v398 = vadd.f32 %v121, %v397
    %v399 = vpop.f32.mrb[0].mxu0
    %v400 = vpop.f32.mrb[0].mxu0
    %v401 = vadd.f32 %v121, %v400
    %v402 = vpop.f32.mrb[0].mxu0
    %403 = vdwg.mxu0
    %404 = vmatprep.subr.bf16.mxu0 0
    %405 = vmatpush1.bf16.msra.mxu0 %v307
    %406 = vmatprep.subr.bf16.mxu0 0
    %407 = vmatpush1.bf16.msra.mxu0 %v308
    %408 = vmatprep.subr.bf16.mxu0 0
    %409 = vmatpush1.bf16.msra.mxu0 %v309
    %410 = vmatprep.subr.bf16.mxu0 0
    %411 = vmatpush1.bf16.msra.mxu0 %v310
    %412 = vmatprep.subr.bf16.mxu0 0
    %413 = vmatpush1.bf16.msra.mxu0 %v311
    %414 = vmatprep.subr.bf16.mxu0 0
    %415 = vmatpush1.bf16.msra.mxu0 %v312
    %416 = vmatprep.subr.bf16.mxu0 0
    %417 = vmatpush1.bf16.msra.mxu0 %v313
    %418 = vmatprep.subr.bf16.mxu0 0
    %419 = vmatpush1.bf16.msra.mxu0 %v314
    %420 = vmatprep.subr.bf16.mxu0 0
    %421 = vmatpush1.bf16.msra.mxu0 %v315
    %422 = vmatprep.subr.bf16.mxu0 0
    %423 = vmatpush1.bf16.msra.mxu0 %v316
    %424 = vmatprep.subr.bf16.mxu0 0
    %425 = vmatpush1.bf16.msra.mxu0 %v317
    %426 = vmatprep.subr.bf16.mxu0 0
    %427 = vmatpush1.bf16.msra.mxu0 %v318
    %428 = vmatprep.subr.bf16.mxu0 0
    %429 = vmatpush1.bf16.msra.mxu0 %v319
    %430 = vmatprep.subr.bf16.mxu0 0
    %431 = vmatpush1.bf16.msra.mxu0 %v320
    %432 = vmatprep.subr.bf16.mxu0 0
    %433 = vmatpush1.bf16.msra.mxu0 %v321
    %434 = vmatprep.subr.bf16.mxu0 0
    %435 = vmatpush1.bf16.msra.mxu0 %v322
    %436 = vmatprep.mubr.bf16.mxu0 %v150
    %437 = vmatmul.mubr.bf16.gmra.mrb[0].mxu0 %v149
    %v438 = vpop.f32.mrb[0].mxu0
    %v439 = vadd.f32 %v390, %v438
    %v440 = vpop.f32.mrb[0].mxu0
    %v441 = vpop.f32.mrb[0].mxu0
    %v442 = vadd.f32 %v393, %v441
    %v443 = vpop.f32.mrb[0].mxu0
    %444 = vmatprep.mubr.bf16.mxu0 %v154
    %445 = vmatmul.mubr.bf16.gmra.mrb[0].mxu0 %v153
    %v446 = vpop.f32.mrb[0].mxu0
    %v447 = vadd.f32 %v398, %v446
    %v448 = vpop.f32.mrb[0].mxu0
    %v449 = vpop.f32.mrb[0].mxu0
    %v450 = vadd.f32 %v401, %v449
    %v451 = vpop.f32.mrb[0].mxu0
    %452 = vdwg.mxu0
    %v453 = vpack.c.bf16 %v442, %v439
    %v454 = vpack.c.bf16 %v450, %v447
    %v457 = vunpack.c.l.b16 %v453
    %v458 = vunpack.c.h.b16 %v453
    %v459 = vunpack.c.l.b16 %v454
    %v460 = vunpack.c.h.b16 %v454
    %v461 = vpack.c.b16 %v457, %v457
    %v462 = vpack.c.b16 %v458, %v458
    %v463 = vpack.c.b16 %v459, %v459
    %v464 = vpack.c.b16 %v460, %v460
    %469 = vst [vmem:[#allocation7] sm:$0xf] %v461
    %470 = vst [vmem:[#allocation7 + $0x4] sm:$0xf] %v462
    %471 = vst [vmem:[#allocation7 + $0x8] sm:$0xf] %v463
    %472 = vst [vmem:[#allocation7 + $0xc] sm:$0xf] %v464
    // Predicated region
    $region22: #{tpu_custom_call.1} parent=1 // pred_check
      _
    $region23: #{tpu_custom_call.1} parent=1 // pred_check_branch
      %474 = sbr.rel (0) target = $region25
    $region24: #{tpu_custom_call.1} parent=1 // pred_region
      %s476 = ssub.s32 256, 256
      %477 = vsyncadd [#allocation4], %s476
      %s478 = sshll.u32 [#allocation7], 4
      %s479 = int_to_ptr.vmem [resolvable:$true] %s478
      %484 = dma.vmem_to_hbm [thread:$0]  %s479, 256, %s3, [#allocation4], 64, 64, 4
    $region25: #{tpu_custom_call.1} parent=1 // pred_fallthru
      _
    // Predicated region
    $region26: #{tpu_custom_call.1} parent=1 // pred_check
      _
    $region27: #{tpu_custom_call.1} parent=1 // pred_check_branch
      %486 = sbr.rel (0) target = $region29
    $region28: #{tpu_custom_call.1} parent=1 // pred_region
      %487 = dma.done [#allocation4], 256
    $region29: #{tpu_custom_call.1} parent=1 // pred_fallthru
      _
    %488 = vsyncpa [#allocation3], 1
    %489 = vsyncpa [#allocation6], 1
    %490 = vsyncpa [#allocation4], 1

</llo_original>
